<compile_context>
chip_gen: v7x
topology: tpu7x:2x2x1
jax: 0.10.0
libtpu: 0.0.40
codegen_flags: <defaults>
</compile_context>

<pallas_src>
import jax
import jax.numpy as jnp
from jax import lax
from jax.experimental import pallas as pl
from jax.experimental.pallas import tpu as pltpu

# Preferred tile sizes (bytes per step, double-buffered, well under the 16 MiB
# v5e default scoped-VMEM budget):
#   x tile 256x512 f32 = 512 KiB, w tile 256x512 = 512 KiB, out 256x256 = 256 KiB.
_TM_PREF = 256   # rows of x / output  (sublane-aligned, multiple of 8)
_TN_PREF = 256   # output features     (lane-aligned, multiple of 128)
_TK_PREF = 512   # contraction dim     (lane-aligned, multiple of 128)


def _pick_tile(dim, pref, align):
    """Largest `align`-multiple <= pref that divides `dim`; else the full dim.

    A full-dim block is always legal under the Mosaic (8,128) tiling rule, so
    the fallback is safe for awkward sizes (at the cost of one big block)."""
    if dim <= pref:
        return dim
    t = (pref // align) * align
    while t >= align:
        if dim % t == 0:
            return t
        t -= align
    return dim


def _addmm_single_k_kernel(x_ref, w_ref, b_ref, o_ref):
    """Whole K in one block: compute the (tm, tn) output tile directly."""
    acc = lax.dot_general(
        x_ref[...], w_ref[...],
        dimension_numbers=(((1,), (1,)), ((), ())),   # x @ w.T on the MXU
        preferred_element_type=jnp.float32,
    )
    o_ref[...] = (acc + b_ref[...]).astype(o_ref.dtype)


def _addmm_kernel(x_ref, w_ref, b_ref, o_ref, acc_ref):
    """One (tm, tn) output tile, accumulating over the K grid axis."""
    k = pl.program_id(2)

    @pl.when(k == 0)
    def _init():
        acc_ref[...] = jnp.zeros_like(acc_ref)

    # x_ref: (tm, tk), w_ref: (tn, tk) -> contract the last dim of both,
    # i.e. x @ w.T, which lowers directly to the MXU (no explicit transpose).
    acc_ref[...] += lax.dot_general(
        x_ref[...], w_ref[...],
        dimension_numbers=(((1,), (1,)), ((), ())),
        preferred_element_type=jnp.float32,
    )

    @pl.when(k == pl.num_programs(2) - 1)
    def _finalize():
        # b_ref: (1, tn) broadcasts over the tm rows of the accumulator.
        o_ref[...] = (acc_ref[...] + b_ref[...]).astype(o_ref.dtype)


@jax.jit
def addmm_pallas(x, weight, bias):
    """out = x @ weight.T + bias, exact-shape output, no padding copies."""
    M, K = x.shape
    N, K2 = weight.shape
    assert K == K2, (K, K2)
    assert bias.shape == (N,), bias.shape

    tm = _pick_tile(M, _TM_PREF, 8)
    tn = _pick_tile(N, _TN_PREF, 128)
    tk = _pick_tile(K, _TK_PREF, 128)
    grid_m, grid_n, grid_k = M // tm, N // tn, K // tk

    bias_2d = bias.reshape(1, N)

    cost = pl.CostEstimate(
        flops=2 * M * N * K,
        transcendentals=0,
        bytes_accessed=4 * (M * K + N * K + N + M * N),
    )

    if grid_k == 1:
        # Fast path: no reduction axis, no scratch accumulator, no pl.when.
        return pl.pallas_call(
            _addmm_single_k_kernel,
            out_shape=jax.ShapeDtypeStruct((M, N), x.dtype),
            grid_spec=pltpu.PrefetchScalarGridSpec(
                num_scalar_prefetch=0,
                grid=(grid_m, grid_n),
                in_specs=[
                    pl.BlockSpec((tm, K), lambda i, j: (i, 0)),   # x
                    pl.BlockSpec((tn, K), lambda i, j: (j, 0)),   # weight (N, K)
                    pl.BlockSpec((1, tn), lambda i, j: (0, j)),   # bias (1, N)
                ],
                out_specs=pl.BlockSpec((tm, tn), lambda i, j: (i, j)),
            ),
            compiler_params=pltpu.CompilerParams(
                dimension_semantics=("parallel", "parallel"),
            ),
            cost_estimate=cost,
        )(x, weight, bias_2d)

    return pl.pallas_call(
        _addmm_kernel,
        out_shape=jax.ShapeDtypeStruct((M, N), x.dtype),
        grid_spec=pltpu.PrefetchScalarGridSpec(
            num_scalar_prefetch=0,
            grid=(grid_m, grid_n, grid_k),
            in_specs=[
                pl.BlockSpec((tm, tk), lambda i, j, k: (i, k)),   # x
                pl.BlockSpec((tn, tk), lambda i, j, k: (j, k)),   # weight (N, K)
                pl.BlockSpec((1, tn), lambda i, j, k: (0, j)),    # bias (1, N)
            ],
            out_specs=pl.BlockSpec((tm, tn), lambda i, j, k: (i, j)),
            scratch_shapes=[pltpu.VMEM((tm, tn), jnp.float32)],
        ),
        compiler_params=pltpu.CompilerParams(
            dimension_semantics=("parallel", "parallel", "arbitrary"),
        ),
        cost_estimate=cost,
    )(x, weight, bias_2d)


class CacheOptimizedLayer:
    """JAX/Pallas port of the PyTorch CacheOptimizedLayer (a linear layer)."""

    def __init__(self, in_features, out_features, key):
        kw, kb = jax.random.split(key)
        # torch.randn-style init (standard normal), float32.
        self.weight = jax.random.normal(kw, (out_features, in_features),
                                        dtype=jnp.float32)
        self.bias = jax.random.normal(kb, (out_features,), dtype=jnp.float32)

    def __call__(self, x):
        # x.contiguous() has no JAX equivalent / is a no-op here.
        return addmm_pallas(x, self.weight, self.bias)


if __name__ == "__main__":
    key = jax.random.PRNGKey(0)
    k_x, k_layer = jax.random.split(key)

    # Small shapes consistent with the module's forward: x (batch, in_features).
    in_features, out_features, batch = 32, 64, 8
    x = jax.random.normal(k_x, (batch, in_features), dtype=jnp.float32)

    layer = CacheOptimizedLayer(in_features, out_features, k_layer)
    out = jax.block_until_ready(layer(x))

    # Reference: plain-JAX addmm.
    ref = x @ layer.weight.T + layer.bias
    assert out.shape == (batch, out_features)
    assert out.dtype == jnp.float32
    assert bool(jnp.allclose(out, ref, rtol=1e-5, atol=1e-5)), (
        float(jnp.max(jnp.abs(out - ref))))

    # Also exercise a tiled (multi-block, K-reduction) configuration.
    k2x, k2l = jax.random.split(jax.random.PRNGKey(1))
    big = CacheOptimizedLayer(1024, 512, k2l)
    xb = jax.random.normal(k2x, (512, 1024), dtype=jnp.float32)
    ob = jax.block_until_ready(big(xb))
    refb = xb @ big.weight.T + big.bias
    assert bool(jnp.allclose(ob, refb, rtol=1e-4, atol=1e-4)), (
        float(jnp.max(jnp.abs(ob - refb))))

    print("KERNEL_OK")
</pallas_src>

<mosaic_0001>
module attributes {stable_mosaic.version = 11 : i64} {
  func.func @_addmm_single_k_kernel(%arg0: i32, %arg1: i32, %arg2: memref<8x32xf32, #tpu.memory_space<vmem>>, %arg3: memref<64x32xf32, #tpu.memory_space<vmem>>, %arg4: memref<1x64xf32, #tpu.memory_space<vmem>>, %arg5: memref<8x64xf32, #tpu.memory_space<vmem>>) attributes {dimension_semantics = [#tpu.dimension_semantics<parallel>, #tpu.dimension_semantics<parallel>], iteration_bounds = array<i64: 1, 1>, scalar_prefetch = 0 : i64, scratch_operands = 0 : i64, tpu.core_type = #tpu.core_type<tc>, window_params = [{transform_indices = @transform_0, window_bounds = array<i64: 8, 32>}, {transform_indices = @transform_1, window_bounds = array<i64: 64, 32>}, {transform_indices = @transform_2, window_bounds = array<i64: 1, 64>}, {transform_indices = @transform_3, window_bounds = array<i64: 8, 64>}]} {
    %c0 = arith.constant 0 : index
    %c0_0 = arith.constant 0 : index
    %0 = vector.load %arg2[%c0, %c0_0] : memref<8x32xf32, #tpu.memory_space<vmem>>, vector<8x32xf32>
    %c0_1 = arith.constant 0 : index
    %c0_2 = arith.constant 0 : index
    %1 = vector.load %arg3[%c0_1, %c0_2] : memref<64x32xf32, #tpu.memory_space<vmem>>, vector<64x32xf32>
    %cst = arith.constant dense<0.000000e+00> : vector<8x64xf32>
    %2 = tpu.matmul %0, %1, %cst {dimension_numbers = #tpu.dot_dimension_numbers<[1], [1], [0], [0], [0, 0, 1, 0], [], []>} : vector<8x32xf32>, vector<64x32xf32>, vector<8x64xf32> -> vector<8x64xf32>
    %c0_3 = arith.constant 0 : index
    %c0_4 = arith.constant 0 : index
    %3 = vector.load %arg4[%c0_3, %c0_4] : memref<1x64xf32, #tpu.memory_space<vmem>>, vector<1x64xf32>
    %4 = vector.broadcast %3 : vector<1x64xf32> to vector<8x64xf32>
    %5 = arith.addf %2, %4 : vector<8x64xf32>
    %c0_5 = arith.constant 0 : index
    %c0_6 = arith.constant 0 : index
    %6 = vector.load %arg5[%c0_5, %c0_6] : memref<8x64xf32, #tpu.memory_space<vmem>>, vector<8x64xf32>
    tpu.vector_store %arg5[%c0_5, %c0_6], %5 {strides = array<i32>} : memref<8x64xf32, #tpu.memory_space<vmem>>, vector<8x64xf32>,
    return
  }
  func.func @transform_0(%arg0: i32, %arg1: i32) -> (i32, i32) {
    %c0_i32 = arith.constant 0 : i32
    %c0_i32_0 = arith.constant 0 : i32
    return %arg0, %c0_i32 : i32, i32
  }
  func.func @transform_1(%arg0: i32, %arg1: i32) -> (i32, i32) {
    %c0_i32 = arith.constant 0 : i32
    %c0_i32_0 = arith.constant 0 : i32
    return %arg1, %c0_i32 : i32, i32
  }
  func.func @transform_2(%arg0: i32, %arg1: i32) -> (i32, i32) {
    %c0_i32 = arith.constant 0 : i32
    %c0_i32_0 = arith.constant 0 : i32
    return %c0_i32, %arg1 : i32, i32
  }
  func.func @transform_3(%arg0: i32, %arg1: i32) -> (i32, i32) {
    %c0_i32 = arith.constant 0 : i32
    return %arg0, %arg1 : i32, i32
  }
}

</mosaic_0001>

<llo_original>
// kernel: addmm_pallas.1
$region0: #{addmm_pallas.1}
  #allocation0 [shape = 'u32[]', space=smem, size = 0x4, offset = 0x4, fixed_abs, tag = 'smem constant byte address 0x4 - core index']
  #allocation1 [shape = 'u32[144,128]{1,0:T(1,128)}', space=vmem, size = 0x12000, scoped, tag = 'internal scratch']
  %s0 = inlined_call_operand.vmem [shape: f32[8,32], index: 0, kind: input, shape index: {}]
  %s1 = inlined_call_operand.vmem [shape: f32[64,32], index: 1, kind: input, shape index: {}]
  %s2 = inlined_call_operand.vmem [shape: f32[1,64], index: 2, kind: input, shape index: {}]
  %s3 = inlined_call_operand.hbm [shape: f32[8,64], index: 3, kind: output, shape index: {}]
  %s4 = sld [smem:[#allocation0]]
  $region22: #{addmm_pallas.1} parent=0
    _
  %s6 = ssub.s32 1, %s4
  %s7 = scalar_select 0, %s6, %s4
  $region1: #{addmm_pallas.1} parent=0
    #allocation2 [shape = 'u8[4096]{0}', space=vmem, size = 0x1000, scoped, tag = 'output window, operand 0, single buffered']
    #allocation3 [shape = 's32[1]{0}', space=sflag, size = 0x4, scoped, tag = 'scoped memory for addmm_pallas.1']
    %8 = vsyncpa [#allocation3], 0
    // Predicated region
    $region2: #{addmm_pallas.1} parent=1 // pred_check
      _
    $region3: #{addmm_pallas.1} parent=1 // pred_check_branch
      %10 = sbr.rel (0) target = $region5
    $region4: #{addmm_pallas.1} parent=1 // pred_region
      _
    $region5: #{addmm_pallas.1} parent=1 // pred_fallthru
      _
    // Predicated region
    $region6: #{addmm_pallas.1} parent=1 // pred_check
      _
    $region7: #{addmm_pallas.1} parent=1 // pred_check_branch
      %12 = sbr.rel (0) target = $region9
    $region8: #{addmm_pallas.1} parent=1 // pred_region
      _
    $region9: #{addmm_pallas.1} parent=1 // pred_fallthru
      _
    // Predicated region
    $region10: #{addmm_pallas.1} parent=1 // pred_check
      _
    $region11: #{addmm_pallas.1} parent=1 // pred_check_branch
      %14 = sbr.rel (0) target = $region13
    $region12: #{addmm_pallas.1} parent=1 // pred_region
      _
    $region13: #{addmm_pallas.1} parent=1 // pred_fallthru
      _
    %v15 = vld [vmem:[%s0] sm:$0xff]
    %v16 = vld [vmem:[%s1] sm:$0xff]
    %v17 = vld [vmem:[%s1 + $0x8] sm:$0xff]
    %v18 = vld [vmem:[%s1 + $0x10] sm:$0xff]
    %v19 = vld [vmem:[%s1 + $0x18] sm:$0xff]
    %v20 = vld [vmem:[%s1 + $0x20] sm:$0xff]
    %v21 = vld [vmem:[%s1 + $0x28] sm:$0xff]
    %v22 = vld [vmem:[%s1 + $0x30] sm:$0xff]
    %v23 = vld [vmem:[%s1 + $0x38] sm:$0xff]
    %v24 = vld [vmem:[%s2] sm:$0x1]
    %v26 = vlaneseq
    %v27 = vshrl.u32 %v26, 7
    %v28 = vsub.s32 0, %v27
    %v29 = vrot.slane %v24, %v28
    %vm31 = vcmask 261120
    %v33 = vsel %vm31, %v15, 0
    %v36 = vsel %vm31, %v16, 0
    %v39 = vsel %vm31, %v17, 0
    %v42 = vsel %vm31, %v18, 0
    %v45 = vsel %vm31, %v19, 0
    %v48 = vsel %vm31, %v20, 0
    %v51 = vsel %vm31, %v21, 0
    %v54 = vsel %vm31, %v22, 0
    %v57 = vsel %vm31, %v23, 0
    %59 = vmatprep.subr.mxu0 0.0
    %60 = vmatpush1.xpose.msra.mxu0 %v36
    %61 = vmatprep.subr.mxu0 0.0
    %62 = vmatpush1.xpose.msra.mxu0 %v39
    %63 = vmatprep.subr.mxu0 0.0
    %64 = vmatpush1.xpose.msra.mxu0 %v42
    %65 = vmatprep.subr.mxu0 0.0
    %66 = vmatpush1.xpose.msra.mxu0 %v45
    %67 = vmatprep.subr.mxu0 0.0
    %68 = vmatpush1.xpose.msra.mxu0 %v48
    %69 = vmatprep.subr.mxu0 0.0
    %70 = vmatpush1.xpose.msra.mxu0 %v51
    %71 = vmatprep.subr.mxu0 0.0
    %72 = vmatpush1.xpose.msra.mxu0 %v54
    %73 = vmatprep.subr.mxu0 0.0
    %74 = vmatpush1.xpose.msra.mxu0 %v57
    %75 = vmatprep.subr.mxu0 0.0
    %76 = vmatpush1.xpose.msra.mxu0 0.0
    %77 = vmatprep.subr.mxu0 0.0
    %78 = vmatpush1.xpose.msra.mxu0 0.0
    %79 = vmatprep.subr.mxu0 0.0
    %80 = vmatpush1.xpose.msra.mxu0 0.0
    %81 = vmatprep.subr.mxu0 0.0
    %82 = vmatpush1.xpose.msra.mxu0 0.0
    %83 = vmatprep.subr.mxu0 0.0
    %84 = vmatpush1.xpose.msra.mxu0 0.0
    %85 = vmatprep.subr.mxu0 0.0
    %86 = vmatpush1.xpose.msra.mxu0 0.0
    %87 = vmatprep.subr.mxu0 0.0
    %88 = vmatpush1.xpose.msra.mxu0 0.0
    %89 = vmatprep.subr.mxu0 0.0
    %90 = vmatpush1.xpose.msra.mxu0 0.0
    %91 = vmatprep.subr.mxu0 0.0
    %92 = vmatpush1.xpose.msra.mxu0 0.0
    %93 = vmatprep.subr.mxu0 0.0
    %94 = vmatpush1.xpose.msra.mxu0 0.0
    %95 = vmatprep.subr.mxu0 0.0
    %96 = vmatpush1.xpose.msra.mxu0 0.0
    %97 = vmatprep.subr.mxu0 0.0
    %98 = vmatpush1.xpose.msra.mxu0 0.0
    %99 = vmatprep.subr.mxu0 0.0
    %100 = vmatpush1.xpose.msra.mxu0 0.0
    %101 = vmatprep.subr.mxu0 0.0
    %102 = vmatpush1.xpose.msra.mxu0 0.0
    %103 = vmatprep.subr.mxu0 0.0
    %104 = vmatpush1.xpose.msra.mxu0 0.0
    %105 = vmatprep.subr.mxu0 0.0
    %106 = vmatpush1.xpose.msra.mxu0 0.0
    %107 = vmatprep.subr.mxu0 0.0
    %108 = vmatpush1.xpose.msra.mxu0 0.0
    %109 = vmatprep.subr.mxu0 0.0
    %110 = vmatpush1.xpose.msra.mxu0 0.0
    %111 = vmatprep.subr.mxu0 0.0
    %112 = vmatpush1.xpose.msra.mxu0 0.0
    %113 = vmatprep.subr.mxu0 0.0
    %114 = vmatpush1.xpose.msra.mxu0 0.0
    %115 = vmatprep.subr.mxu0 0.0
    %116 = vmatpush1.xpose.msra.mxu0 0.0
    %117 = vmatprep.subr.mxu0 0.0
    %118 = vmatpush1.xpose.msra.mxu0 0.0
    %119 = vmatprep.subr.mxu0 0.0
    %120 = vmatpush1.xpose.msra.mxu0 0.0
    %121 = vmatprep.subr.mxu0 0.0
    %122 = vmatpush1.xpose.msra.mxu0 0.0
    %123 = vmatprep.mubr.f32.mxu0 0.0
    %124 = vmatmul.mubr.f32.gmra.mrb[0].mxu0 %v33
    %v125 = vpop.f32.mrb[0].mxu0
    %v126 = vadd.f32 %v29, %v125
    %v127 = vpop.f32.mrb[0].mxu0
    %128 = vdwg.mxu0
    %vm129 = vcmask 523264
    %130 = vst.msk [vmem:[#allocation2] sm:$0xff] %vm129, %v126
    // Predicated region
    $region14: #{addmm_pallas.1} parent=1 // pred_check
      _
    $region15: #{addmm_pallas.1} parent=1 // pred_check_branch
      %132 = sbr.rel (0) target = $region17
    $region16: #{addmm_pallas.1} parent=1 // pred_region
      %s134 = ssub.s32 128, 128
      %135 = vsyncadd [#allocation3], %s134
      %s137 = sshll.u32 [#allocation2], 4
      %s138 = int_to_ptr.vmem [resolvable:$true] %s137
      %140 = dma.vmem_to_hbm [thread:$0]  %s138, 128, %s3, [#allocation3]
    $region17: #{addmm_pallas.1} parent=1 // pred_fallthru
      _
    // Predicated region
    $region18: #{addmm_pallas.1} parent=1 // pred_check
      _
    $region19: #{addmm_pallas.1} parent=1 // pred_check_branch
      %142 = sbr.rel (0) target = $region21
    $region20: #{addmm_pallas.1} parent=1 // pred_region
      %143 = dma.done [#allocation3], 128
    $region21: #{addmm_pallas.1} parent=1 // pred_fallthru
      _
    %144 = vsyncpa [#allocation3], 1

</llo_original>
